<compile_context>
chip_gen: v7x
topology: tpu7x:2x2x1
jax: 0.10.0
libtpu: 0.0.40
codegen_flags: <defaults>
</compile_context>

<pallas_src>
import functools

import jax
import jax.numpy as jnp
from jax import lax
from jax.experimental import pallas as pl
from jax.experimental.pallas import tpu as pltpu


def _cosine_dist_kernel(x_ref, y_ref, o_ref, acc_ref, xsq_ref, ysq_ref):
    k = pl.program_id(2)

    @pl.when(k == 0)
    def _init():
        acc_ref[...] = jnp.zeros_like(acc_ref)
        xsq_ref[...] = jnp.zeros_like(xsq_ref)
        ysq_ref[...] = jnp.zeros_like(ysq_ref)

    x = x_ref[...]                      # (TM, TK), native dtype -> MXU
    y = y_ref[...]                      # (TN, TK)

    # Partial x @ y^T: contract the last dims directly (no XLU transpose).
    acc_ref[...] += lax.dot_general(
        x, y,
        dimension_numbers=(((1,), (1,)), ((), ())),
        preferred_element_type=jnp.float32)

    # Partial squared row-sums, always accumulated in f32 (robust for bf16 in).
    xf = x.astype(jnp.float32)
    yf = y.astype(jnp.float32)
    xsq_ref[...] += jnp.sum(xf * xf, axis=1, keepdims=True)          # (TM, 1)

    # Lane-oriented (1, TN) y-norm partial via a ones-row matmul (MXU has
    # slack); avoids any transpose when broadcasting across the output tile.
    ones_row = jnp.ones((1, yf.shape[1]), jnp.float32)
    ysq_ref[...] += lax.dot_general(
        ones_row, yf * yf,
        dimension_numbers=(((1,), (1,)), ((), ())),
        preferred_element_type=jnp.float32)                          # (1, TN)

    @pl.when(k == pl.num_programs(2) - 1)
    def _finalize():
        inv_x = lax.rsqrt(xsq_ref[...])           # (TM, 1), EUP
        inv_y = lax.rsqrt(ysq_ref[...])           # (1, TN), EUP
        cosine = acc_ref[...] * inv_x * inv_y     # (TM, TN) broadcast multiply
        o_ref[...] = (1.0 - cosine).astype(o_ref.dtype)


def _round_up(a: int, b: int) -> int:
    return ((a + b - 1) // b) * b


@functools.partial(jax.jit, static_argnames=("tm", "tn", "tk"))
def cosine_dist(x, y, *, tm: int = 256, tn: int = 256, tk: int = 512):
    """Pairwise cosine distance between rows of x (bs1, d) and y (bs2, d)."""
    bs1, d = x.shape
    bs2, d2 = y.shape
    assert d == d2, "feature dims must match"

    # Tile sizes: sublane/lane aligned, clamped for small problems.
    TM = min(tm, _round_up(bs1, 8))
    TN = min(tn, _round_up(bs2, 128))      # lane-dense output stores
    TK = min(tk, _round_up(d, 128))

    M = _round_up(bs1, TM)
    N = _round_up(bs2, TN)
    K = _round_up(d, TK)

    xp = x if (M == bs1 and K == d) else jnp.pad(x, ((0, M - bs1), (0, K - d)))
    yp = y if (N == bs2 and K == d) else jnp.pad(y, ((0, N - bs2), (0, K - d)))

    grid = (M // TM, N // TN, K // TK)

    out = pl.pallas_call(
        _cosine_dist_kernel,
        out_shape=jax.ShapeDtypeStruct((M, N), jnp.float32),
        grid_spec=pltpu.PrefetchScalarGridSpec(
            num_scalar_prefetch=0,
            grid=grid,
            in_specs=[
                pl.BlockSpec((TM, TK), lambda i, j, k: (i, k)),
                pl.BlockSpec((TN, TK), lambda i, j, k: (j, k)),
            ],
            out_specs=pl.BlockSpec((TM, TN), lambda i, j, k: (i, j)),
            scratch_shapes=[
                pltpu.VMEM((TM, TN), jnp.float32),   # dot accumulator
                pltpu.VMEM((TM, 1), jnp.float32),    # sum(x^2) accumulator
                pltpu.VMEM((1, TN), jnp.float32),    # sum(y^2) accumulator
            ],
        ),
        compiler_params=pltpu.CompilerParams(
            dimension_semantics=("parallel", "parallel", "arbitrary")),
    )(xp, yp)

    return out[:bs1, :bs2]


def cosine_dist_ref(x, y):
    """Pure-JAX reference mirroring the PyTorch forward exactly."""
    frac_up = x @ y.T
    frac_down = (jnp.sqrt(jnp.sum(x ** 2, axis=1))[:, None]
                 * jnp.sqrt(jnp.sum(y ** 2, axis=1))[None, :])
    return 1.0 - frac_up / frac_down


if __name__ == "__main__":
    key = jax.random.PRNGKey(0)
    kx, ky, kx2, ky2 = jax.random.split(key, 4)

    # Small shapes implied by the module (pairwise row distances, hidden last).
    bs1, bs2, hidden = 8, 16, 32
    x = jax.random.normal(kx, (bs1, hidden), dtype=jnp.float32)
    y = jax.random.normal(ky, (bs2, hidden), dtype=jnp.float32)

    out = jax.block_until_ready(cosine_dist(x, y))
    ref = cosine_dist_ref(x, y)
    assert out.shape == (bs1, bs2)
    assert jnp.allclose(out, ref, atol=1e-3, rtol=1e-3), \
        float(jnp.max(jnp.abs(out - ref)))

    # Larger case exercising the multi-tile (i, j, k) grid + k accumulation
    # (grid = (1, 2, 3) with these tile sizes, includes row/col/feature padding).
    b1, b2, d = 40, 200, 300
    x2 = jax.random.normal(kx2, (b1, d), dtype=jnp.float32)
    y2 = jax.random.normal(ky2, (b2, d), dtype=jnp.float32)

    out2 = jax.block_until_ready(cosine_dist(x2, y2, tm=128, tn=128, tk=128))
    ref2 = cosine_dist_ref(x2, y2)
    assert out2.shape == (b1, b2)
    assert jnp.allclose(out2, ref2, atol=5e-3, rtol=5e-3), \
        float(jnp.max(jnp.abs(out2 - ref2)))

    # TODO(synk): zero-norm rows produce NaN (0/0), matching the PyTorch
    # reference; add an epsilon if callers need finite outputs.
    print("KERNEL_OK")
</pallas_src>

<mosaic_0001>
module attributes {stable_mosaic.version = 11 : i64} {
  func.func @_cosine_dist_kernel(%arg0: i32, %arg1: i32, %arg2: i32, %arg3: memref<8x128xf32, #tpu.memory_space<vmem>>, %arg4: memref<128x128xf32, #tpu.memory_space<vmem>>, %arg5: memref<8x128xf32, #tpu.memory_space<vmem>>, %arg6: memref<8x128xf32, #tpu.memory_space<vmem>>, %arg7: memref<8x1xf32, #tpu.memory_space<vmem>>, %arg8: memref<1x128xf32, #tpu.memory_space<vmem>>) attributes {dimension_semantics = [#tpu.dimension_semantics<parallel>, #tpu.dimension_semantics<parallel>, #tpu.dimension_semantics<arbitrary>], iteration_bounds = array<i64: 1, 1, 1>, scalar_prefetch = 0 : i64, scratch_operands = 3 : i64, tpu.core_type = #tpu.core_type<tc>, window_params = [{transform_indices = @transform_0, window_bounds = array<i64: 8, 128>}, {transform_indices = @transform_1, window_bounds = array<i64: 128, 128>}, {transform_indices = @transform_2, window_bounds = array<i64: 8, 128>}]} {
    %c0_i32 = arith.constant 0 : i32
    %0 = arith.cmpi eq, %arg2, %c0_i32 : i32
    %1 = arith.extui %0 : i1 to i32
    %c0_i32_0 = arith.constant 0 : i32
    %2 = arith.cmpi ne, %1, %c0_i32_0 : i32
    scf.if %2 {
      %cst_21 = arith.constant 0.000000e+00 : f32
      %24 = vector.broadcast %cst_21 : f32 to vector<8x128xf32>
      %c0_22 = arith.constant 0 : index
      %c0_23 = arith.constant 0 : index
      %25 = vector.load %arg6[%c0_22, %c0_23] : memref<8x128xf32, #tpu.memory_space<vmem>>, vector<8x128xf32>
      tpu.vector_store %arg6[%c0_22, %c0_23], %24 {strides = array<i32>} : memref<8x128xf32, #tpu.memory_space<vmem>>, vector<8x128xf32>,
      %cst_24 = arith.constant 0.000000e+00 : f32
      %26 = vector.broadcast %cst_24 : f32 to vector<8x1xf32>
      %c0_25 = arith.constant 0 : index
      %c0_26 = arith.constant 0 : index
      %27 = vector.load %arg7[%c0_25, %c0_26] : memref<8x1xf32, #tpu.memory_space<vmem>>, vector<8x1xf32>
      tpu.vector_store %arg7[%c0_25, %c0_26], %26 {strides = array<i32>} : memref<8x1xf32, #tpu.memory_space<vmem>>, vector<8x1xf32>,
      %cst_27 = arith.constant 0.000000e+00 : f32
      %28 = vector.broadcast %cst_27 : f32 to vector<1x128xf32>
      %c0_28 = arith.constant 0 : index
      %c0_29 = arith.constant 0 : index
      %29 = vector.load %arg8[%c0_28, %c0_29] : memref<1x128xf32, #tpu.memory_space<vmem>>, vector<1x128xf32>
      tpu.vector_store %arg8[%c0_28, %c0_29], %28 {strides = array<i32>} : memref<1x128xf32, #tpu.memory_space<vmem>>, vector<1x128xf32>,
    } else {
    }
    %c0 = arith.constant 0 : index
    %c0_1 = arith.constant 0 : index
    %3 = vector.load %arg3[%c0, %c0_1] : memref<8x128xf32, #tpu.memory_space<vmem>>, vector<8x128xf32>
    %c0_2 = arith.constant 0 : index
    %c0_3 = arith.constant 0 : index
    %4 = vector.load %arg4[%c0_2, %c0_3] : memref<128x128xf32, #tpu.memory_space<vmem>>, vector<128x128xf32>
    %c0_4 = arith.constant 0 : index
    %c0_5 = arith.constant 0 : index
    %5 = vector.load %arg6[%c0_4, %c0_5] : memref<8x128xf32, #tpu.memory_space<vmem>>, vector<8x128xf32>
    %cst = arith.constant dense<0.000000e+00> : vector<8x128xf32>
    %6 = tpu.matmul %3, %4, %cst {dimension_numbers = #tpu.dot_dimension_numbers<[1], [1], [0], [0], [0, 0, 1, 0], [], []>} : vector<8x128xf32>, vector<128x128xf32>, vector<8x128xf32> -> vector<8x128xf32>
    %7 = arith.addf %5, %6 : vector<8x128xf32>
    %c0_6 = arith.constant 0 : index
    %c0_7 = arith.constant 0 : index
    %8 = vector.load %arg6[%c0_6, %c0_7] : memref<8x128xf32, #tpu.memory_space<vmem>>, vector<8x128xf32>
    tpu.vector_store %arg6[%c0_6, %c0_7], %7 {strides = array<i32>} : memref<8x128xf32, #tpu.memory_space<vmem>>, vector<8x128xf32>,
    %c0_8 = arith.constant 0 : index
    %c0_9 = arith.constant 0 : index
    %9 = vector.load %arg7[%c0_8, %c0_9] : memref<8x1xf32, #tpu.memory_space<vmem>>, vector<8x1xf32>
    %10 = arith.mulf %3, %3 : vector<8x128xf32>
    %cst_10 = arith.constant dense<0.000000e+00> : vector<8xf32>
    %11 = vector.multi_reduction <add>, %10, %cst_10 [1] : vector<8x128xf32> to vector<8xf32>
    %12 = vector.shape_cast %11 : vector<8xf32> to vector<8x1xf32>
    %13 = arith.addf %9, %12 : vector<8x1xf32>
    %c0_11 = arith.constant 0 : index
    %c0_12 = arith.constant 0 : index
    %14 = vector.load %arg7[%c0_11, %c0_12] : memref<8x1xf32, #tpu.memory_space<vmem>>, vector<8x1xf32>
    tpu.vector_store %arg7[%c0_11, %c0_12], %13 {strides = array<i32>} : memref<8x1xf32, #tpu.memory_space<vmem>>, vector<8x1xf32>,
    %cst_13 = arith.constant 1.000000e+00 : f32
    %15 = vector.broadcast %cst_13 : f32 to vector<1x128xf32>
    %c0_14 = arith.constant 0 : index
    %c0_15 = arith.constant 0 : index
    %16 = vector.load %arg8[%c0_14, %c0_15] : memref<1x128xf32, #tpu.memory_space<vmem>>, vector<1x128xf32>
    %17 = arith.mulf %4, %4 : vector<128x128xf32>
    %cst_16 = arith.constant dense<0.000000e+00> : vector<1x128xf32>
    %18 = tpu.matmul %15, %17, %cst_16 {dimension_numbers = #tpu.dot_dimension_numbers<[1], [1], [0], [0], [0, 0, 1, 0], [], []>} : vector<1x128xf32>, vector<128x128xf32>, vector<1x128xf32> -> vector<1x128xf32>
    %19 = arith.addf %16, %18 : vector<1x128xf32>
    %c0_17 = arith.constant 0 : index
    %c0_18 = arith.constant 0 : index
    %20 = vector.load %arg8[%c0_17, %c0_18] : memref<1x128xf32, #tpu.memory_space<vmem>>, vector<1x128xf32>
    tpu.vector_store %arg8[%c0_17, %c0_18], %19 {strides = array<i32>} : memref<1x128xf32, #tpu.memory_space<vmem>>, vector<1x128xf32>,
    %c0_i32_19 = arith.constant 0 : i32
    %21 = arith.cmpi eq, %arg2, %c0_i32_19 : i32
    %22 = arith.extui %21 : i1 to i32
    %c0_i32_20 = arith.constant 0 : i32
    %23 = arith.cmpi ne, %22, %c0_i32_20 : i32
    scf.if %23 {
      %c0_21 = arith.constant 0 : index
      %c0_22 = arith.constant 0 : index
      %24 = vector.load %arg7[%c0_21, %c0_22] : memref<8x1xf32, #tpu.memory_space<vmem>>, vector<8x1xf32>
      %25 = math.rsqrt %24 : vector<8x1xf32>
      %c0_23 = arith.constant 0 : index
      %c0_24 = arith.constant 0 : index
      %26 = vector.load %arg8[%c0_23, %c0_24] : memref<1x128xf32, #tpu.memory_space<vmem>>, vector<1x128xf32>
      %27 = math.rsqrt %26 : vector<1x128xf32>
      %c0_25 = arith.constant 0 : index
      %c0_26 = arith.constant 0 : index
      %28 = vector.load %arg6[%c0_25, %c0_26] : memref<8x128xf32, #tpu.memory_space<vmem>>, vector<8x128xf32>
      %29 = vector.broadcast %25 : vector<8x1xf32> to vector<8x128xf32>
      %30 = arith.mulf %28, %29 : vector<8x128xf32>
      %31 = vector.broadcast %27 : vector<1x128xf32> to vector<8x128xf32>
      %32 = arith.mulf %30, %31 : vector<8x128xf32>
      %cst_27 = arith.constant 1.000000e+00 : f32
      %33 = vector.broadcast %cst_27 : f32 to vector<8x128xf32>
      %34 = arith.subf %33, %32 : vector<8x128xf32>
      %c0_28 = arith.constant 0 : index
      %c0_29 = arith.constant 0 : index
      %35 = vector.load %arg5[%c0_28, %c0_29] : memref<8x128xf32, #tpu.memory_space<vmem>>, vector<8x128xf32>
      tpu.vector_store %arg5[%c0_28, %c0_29], %34 {strides = array<i32>} : memref<8x128xf32, #tpu.memory_space<vmem>>, vector<8x128xf32>,
    } else {
    }
    return
  }
  func.func @transform_0(%arg0: i32, %arg1: i32, %arg2: i32) -> (i32, i32) {
    %c0_i32 = arith.constant 0 : i32
    return %arg0, %arg2 : i32, i32
  }
  func.func @transform_1(%arg0: i32, %arg1: i32, %arg2: i32) -> (i32, i32) {
    %c0_i32 = arith.constant 0 : i32
    return %arg1, %arg2 : i32, i32
  }
  func.func @transform_2(%arg0: i32, %arg1: i32, %arg2: i32) -> (i32, i32) {
    %c0_i32 = arith.constant 0 : i32
    return %arg0, %arg1 : i32, i32
  }
}

</mosaic_0001>

<llo_original>
// kernel: cosine_dist.1
$region0: #{cosine_dist.1}
  #allocation0 [shape = 'u32[]', space=smem, size = 0x4, offset = 0x4, fixed_abs, tag = 'smem constant byte address 0x4 - core index']
  #allocation1 [shape = 'u32[144,128]{1,0:T(1,128)}', space=vmem, size = 0x12000, scoped, tag = 'internal scratch']
  #allocation2 [shape = 'f32[8,128]{1,0:T(8,128)}', space=vmem, size = 0x1000, scoped, tag = 'scratch operand']
  #allocation3 [shape = 'f32[8,1]{1,0:T(8,128)}', space=vmem, size = 0x1000, scoped, tag = 'scratch operand']
  #allocation4 [shape = 'f32[1,128]{1,0:T(1,128)}', space=vmem, size = 0x200, scoped, tag = 'scratch operand']
  %s0 = inlined_call_operand.vmem [shape: f32[8,128], index: 0, kind: input, shape index: {}]
  %s1 = inlined_call_operand.vmem [shape: f32[128,128], index: 1, kind: input, shape index: {}]
  %s2 = inlined_call_operand.hbm [shape: f32[8,128], index: 2, kind: output, shape index: {}]
  %s3 = sld [smem:[#allocation0]]
  $region26: #{cosine_dist.1} parent=0
    _
  %s5 = ssub.s32 1, %s3
  %s6 = scalar_select 0, %s5, %s3
  $region1: #{cosine_dist.1} parent=0
    #allocation5 [shape = 'u8[4096]{0}', space=vmem, size = 0x1000, scoped, tag = 'output window, operand 0, single buffered']
    #allocation6 [shape = 's32[1]{0}', space=sflag, size = 0x4, scoped, tag = 'scoped memory for cosine_dist.1']
    %7 = vsyncpa [#allocation6], 0
    // Predicated region
    $region2: #{cosine_dist.1} parent=1 // pred_check
      _
    $region3: #{cosine_dist.1} parent=1 // pred_check_branch
      %9 = sbr.rel (0) target = $region5
    $region4: #{cosine_dist.1} parent=1 // pred_region
      _
    $region5: #{cosine_dist.1} parent=1 // pred_fallthru
      _
    // Predicated region
    $region6: #{cosine_dist.1} parent=1 // pred_check
      _
    $region7: #{cosine_dist.1} parent=1 // pred_check_branch
      %11 = sbr.rel (0) target = $region9
    $region8: #{cosine_dist.1} parent=1 // pred_region
      _
    $region9: #{cosine_dist.1} parent=1 // pred_fallthru
      _
    %p12 = scmp.eq.s32.totalorder 0, 0
    // Predicated region
    $region10: #{cosine_dist.1} parent=1 // pred_check
      %p13 = pneg %p12
    $region11: #{cosine_dist.1} parent=1 // pred_check_branch
      %15 = sbr.rel (%p13) target = $region13
    $region12: #{cosine_dist.1} parent=1 // pred_region
      %16 = vst [vmem:[#allocation2] sm:$0xff] 0.0
      %vm17 = vcmask 7168
      %18 = vst.msk [vmem:[#allocation3] sm:$0xff] %vm17, 0.0
      %19 = vst [vmem:[#allocation4] sm:$0x1] 0.0
    $region13: #{cosine_dist.1} parent=1 // pred_fallthru
      _
    %v20 = vld [vmem:[%s0] sm:$0xff]
    %v21 = vld [vmem:[%s1] sm:$0xff]
    %v22 = vld [vmem:[%s1 + $0x8] sm:$0xff]
    %v23 = vld [vmem:[%s1 + $0x10] sm:$0xff]
    %v24 = vld [vmem:[%s1 + $0x18] sm:$0xff]
    %v25 = vld [vmem:[%s1 + $0x20] sm:$0xff]
    %v26 = vld [vmem:[%s1 + $0x28] sm:$0xff]
    %v27 = vld [vmem:[%s1 + $0x30] sm:$0xff]
    %v28 = vld [vmem:[%s1 + $0x38] sm:$0xff]
    %v29 = vld [vmem:[%s1 + $0x40] sm:$0xff]
    %v30 = vld [vmem:[%s1 + $0x48] sm:$0xff]
    %v31 = vld [vmem:[%s1 + $0x50] sm:$0xff]
    %v32 = vld [vmem:[%s1 + $0x58] sm:$0xff]
    %v33 = vld [vmem:[%s1 + $0x60] sm:$0xff]
    %v34 = vld [vmem:[%s1 + $0x68] sm:$0xff]
    %v35 = vld [vmem:[%s1 + $0x70] sm:$0xff]
    %v36 = vld [vmem:[%s1 + $0x78] sm:$0xff]
    %v37 = vld [vmem:[#allocation2] sm:$0xff]
    %38 = vmatprep.subr.mxu0 0.0
    %39 = vmatpush1.xpose.msra.mxu0 %v21
    %40 = vmatprep.subr.mxu0 0.0
    %41 = vmatpush1.xpose.msra.mxu0 %v22
    %42 = vmatprep.subr.mxu0 0.0
    %43 = vmatpush1.xpose.msra.mxu0 %v23
    %44 = vmatprep.subr.mxu0 0.0
    %45 = vmatpush1.xpose.msra.mxu0 %v24
    %46 = vmatprep.subr.mxu0 0.0
    %47 = vmatpush1.xpose.msra.mxu0 %v25
    %48 = vmatprep.subr.mxu0 0.0
    %49 = vmatpush1.xpose.msra.mxu0 %v26
    %50 = vmatprep.subr.mxu0 0.0
    %51 = vmatpush1.xpose.msra.mxu0 %v27
    %52 = vmatprep.subr.mxu0 0.0
    %53 = vmatpush1.xpose.msra.mxu0 %v28
    %54 = vmatprep.subr.mxu0 0.0
    %55 = vmatpush1.xpose.msra.mxu0 %v29
    %56 = vmatprep.subr.mxu0 0.0
    %57 = vmatpush1.xpose.msra.mxu0 %v30
    %58 = vmatprep.subr.mxu0 0.0
    %59 = vmatpush1.xpose.msra.mxu0 %v31
    %60 = vmatprep.subr.mxu0 0.0
    %61 = vmatpush1.xpose.msra.mxu0 %v32
    %62 = vmatprep.subr.mxu0 0.0
    %63 = vmatpush1.xpose.msra.mxu0 %v33
    %64 = vmatprep.subr.mxu0 0.0
    %65 = vmatpush1.xpose.msra.mxu0 %v34
    %66 = vmatprep.subr.mxu0 0.0
    %67 = vmatpush1.xpose.msra.mxu0 %v35
    %68 = vmatprep.subr.mxu0 0.0
    %69 = vmatpush1.xpose.msra.mxu0 %v36
    %70 = vmatprep.subr.mxu0 0.0
    %71 = vmatpush1.xpose.msra.mxu0 0.0
    %72 = vmatprep.subr.mxu0 0.0
    %73 = vmatpush1.xpose.msra.mxu0 0.0
    %74 = vmatprep.subr.mxu0 0.0
    %75 = vmatpush1.xpose.msra.mxu0 0.0
    %76 = vmatprep.subr.mxu0 0.0
    %77 = vmatpush1.xpose.msra.mxu0 0.0
    %78 = vmatprep.subr.mxu0 0.0
    %79 = vmatpush1.xpose.msra.mxu0 0.0
    %80 = vmatprep.subr.mxu0 0.0
    %81 = vmatpush1.xpose.msra.mxu0 0.0
    %82 = vmatprep.subr.mxu0 0.0
    %83 = vmatpush1.xpose.msra.mxu0 0.0
    %84 = vmatprep.subr.mxu0 0.0
    %85 = vmatpush1.xpose.msra.mxu0 0.0
    %86 = vmatprep.subr.mxu0 0.0
    %87 = vmatpush1.xpose.msra.mxu0 0.0
    %88 = vmatprep.subr.mxu0 0.0
    %89 = vmatpush1.xpose.msra.mxu0 0.0
    %90 = vmatprep.subr.mxu0 0.0
    %91 = vmatpush1.xpose.msra.mxu0 0.0
    %92 = vmatprep.subr.mxu0 0.0
    %93 = vmatpush1.xpose.msra.mxu0 0.0
    %94 = vmatprep.subr.mxu0 0.0
    %95 = vmatpush1.xpose.msra.mxu0 0.0
    %96 = vmatprep.subr.mxu0 0.0
    %97 = vmatpush1.xpose.msra.mxu0 0.0
    %98 = vmatprep.subr.mxu0 0.0
    %99 = vmatpush1.xpose.msra.mxu0 0.0
    %100 = vmatprep.subr.mxu0 0.0
    %101 = vmatpush1.xpose.msra.mxu0 0.0
    %102 = vmatprep.mubr.f32.mxu0 0.0
    %103 = vmatmul.mubr.f32.gmra.mrb[0].mxu0 %v20
    %v104 = vpop.f32.mrb[0].mxu0
    %v105 = vadd.f32 0.0, %v104
    %v106 = vpop.f32.mrb[0].mxu0
    %107 = vdwg.mxu0
    %v108 = vadd.f32 %v37, %v105
    %109 = vst [vmem:[#allocation2] sm:$0xff] %v108
    %v110 = vld [vmem:[#allocation3] sm:$0xff]
    %v111 = vmul.f32 %v20, %v20
    %112 = vadd.xlane.f32.xlu0 %v111
    %v113 = vpop.xlane.xlu0 %112
    %v114 = vadd.f32 %v110, %v113
    %vm115 = vcmask 7168
    %116 = vst.msk [vmem:[#allocation3] sm:$0xff] %vm115, %v114
    %v117 = vld [vmem:[#allocation4] sm:$0x1]
    %v118 = vmul.f32 %v21, %v21
    %v119 = vmul.f32 %v22, %v22
    %v120 = vmul.f32 %v23, %v23
    %v121 = vmul.f32 %v24, %v24
    %v122 = vmul.f32 %v25, %v25
    %v123 = vmul.f32 %v26, %v26
    %v124 = vmul.f32 %v27, %v27
    %v125 = vmul.f32 %v28, %v28
    %v126 = vmul.f32 %v29, %v29
    %v127 = vmul.f32 %v30, %v30
    %v128 = vmul.f32 %v31, %v31
    %v129 = vmul.f32 %v32, %v32
    %v130 = vmul.f32 %v33, %v33
    %v131 = vmul.f32 %v34, %v34
    %v132 = vmul.f32 %v35, %v35
    %v133 = vmul.f32 %v36, %v36
    %134 = vmatprep.subr.mxu0 0.0
    %135 = vmatpush1.xpose.msra.mxu0 %v118
    %136 = vmatprep.subr.mxu0 0.0
    %137 = vmatpush1.xpose.msra.mxu0 %v119
    %138 = vmatprep.subr.mxu0 0.0
    %139 = vmatpush1.xpose.msra.mxu0 %v120
    %140 = vmatprep.subr.mxu0 0.0
    %141 = vmatpush1.xpose.msra.mxu0 %v121
    %142 = vmatprep.subr.mxu0 0.0
    %143 = vmatpush1.xpose.msra.mxu0 %v122
    %144 = vmatprep.subr.mxu0 0.0
    %145 = vmatpush1.xpose.msra.mxu0 %v123
    %146 = vmatprep.subr.mxu0 0.0
    %147 = vmatpush1.xpose.msra.mxu0 %v124
    %148 = vmatprep.subr.mxu0 0.0
    %149 = vmatpush1.xpose.msra.mxu0 %v125
    %150 = vmatprep.subr.mxu0 0.0
    %151 = vmatpush1.xpose.msra.mxu0 %v126
    %152 = vmatprep.subr.mxu0 0.0
    %153 = vmatpush1.xpose.msra.mxu0 %v127
    %154 = vmatprep.subr.mxu0 0.0
    %155 = vmatpush1.xpose.msra.mxu0 %v128
    %156 = vmatprep.subr.mxu0 0.0
    %157 = vmatpush1.xpose.msra.mxu0 %v129
    %158 = vmatprep.subr.mxu0 0.0
    %159 = vmatpush1.xpose.msra.mxu0 %v130
    %160 = vmatprep.subr.mxu0 0.0
    %161 = vmatpush1.xpose.msra.mxu0 %v131
    %162 = vmatprep.subr.mxu0 0.0
    %163 = vmatpush1.xpose.msra.mxu0 %v132
    %164 = vmatprep.subr.mxu0 0.0
    %165 = vmatpush1.xpose.msra.mxu0 %v133
    %166 = vmatprep.subr.mxu0 0.0
    %167 = vmatpush1.xpose.msra.mxu0 0.0
    %168 = vmatprep.subr.mxu0 0.0
    %169 = vmatpush1.xpose.msra.mxu0 0.0
    %170 = vmatprep.subr.mxu0 0.0
    %171 = vmatpush1.xpose.msra.mxu0 0.0
    %172 = vmatprep.subr.mxu0 0.0
    %173 = vmatpush1.xpose.msra.mxu0 0.0
    %174 = vmatprep.subr.mxu0 0.0
    %175 = vmatpush1.xpose.msra.mxu0 0.0
    %176 = vmatprep.subr.mxu0 0.0
    %177 = vmatpush1.xpose.msra.mxu0 0.0
    %178 = vmatprep.subr.mxu0 0.0
    %179 = vmatpush1.xpose.msra.mxu0 0.0
    %180 = vmatprep.subr.mxu0 0.0
    %181 = vmatpush1.xpose.msra.mxu0 0.0
    %182 = vmatprep.subr.mxu0 0.0
    %183 = vmatpush1.xpose.msra.mxu0 0.0
    %184 = vmatprep.subr.mxu0 0.0
    %185 = vmatpush1.xpose.msra.mxu0 0.0
    %186 = vmatprep.subr.mxu0 0.0
    %187 = vmatpush1.xpose.msra.mxu0 0.0
    %188 = vmatprep.subr.mxu0 0.0
    %189 = vmatpush1.xpose.msra.mxu0 0.0
    %190 = vmatprep.subr.mxu0 0.0
    %191 = vmatpush1.xpose.msra.mxu0 0.0
    %192 = vmatprep.subr.mxu0 0.0
    %193 = vmatpush1.xpose.msra.mxu0 0.0
    %194 = vmatprep.subr.mxu0 0.0
    %195 = vmatpush1.xpose.msra.mxu0 0.0
    %196 = vmatprep.subr.mxu0 0.0
    %197 = vmatpush1.xpose.msra.mxu0 0.0
    %198 = vmatprep.mubr.f32.mxu0 0.0
    %199 = vmatmul.mubr.f32.gmra.mrb[0].mxu0 1.0
    %v200 = vpop.f32.mrb[0].mxu0
    %v201 = vadd.f32 0.0, %v200
    %v202 = vpop.f32.mrb[0].mxu0
    %203 = vdwg.mxu0
    %v204 = vadd.f32 %v117, %v201
    %205 = vst [vmem:[#allocation4] sm:$0x1] %v204
    // Predicated region
    $region14: #{cosine_dist.1} parent=1 // pred_check
      %p206 = pneg %p12
    $region15: #{cosine_dist.1} parent=1 // pred_check_branch
      %208 = sbr.rel (%p206) target = $region17
    $region16: #{cosine_dist.1} parent=1 // pred_region
      %v209 = vld [vmem:[#allocation3] sm:$0xff]
      %v210 = vrsqrt.pop %v209
      %v211 = vld [vmem:[#allocation4] sm:$0x1]
      %v212 = vrsqrt.pop %v211
      %v213 = vld [vmem:[#allocation2] sm:$0xff]
      %215 = vset.pattern.permute.xlu0 0
      %216 = vperm.xlu0 %215, %v210
      %v217 = vpop.permute.xlu0 %216
      %v219 = vmul.f32 %v213, %v217
      %v221 = vlaneseq
      %v222 = vshrl.u32 %v221, 7
      %v223 = vsub.s32 0, %v222
      %v224 = vrot.slane %v212, %v223
      %v226 = vmul.f32 %v219, %v224
      %v227 = vsub.f32 1.0, %v226
      %228 = vst [vmem:[#allocation5] sm:$0xff] %v227
    $region17: #{cosine_dist.1} parent=1 // pred_fallthru
      _
    // Predicated region
    $region18: #{cosine_dist.1} parent=1 // pred_check
      _
    $region19: #{cosine_dist.1} parent=1 // pred_check_branch
      %230 = sbr.rel (0) target = $region21
    $region20: #{cosine_dist.1} parent=1 // pred_region
      %s232 = ssub.s32 128, 128
      %233 = vsyncadd [#allocation6], %s232
      %s235 = sshll.u32 [#allocation5], 4
      %s236 = int_to_ptr.vmem [resolvable:$true] %s235
      %238 = dma.vmem_to_hbm [thread:$0]  %s236, 128, %s2, [#allocation6]
    $region21: #{cosine_dist.1} parent=1 // pred_fallthru
      _
    // Predicated region
    $region22: #{cosine_dist.1} parent=1 // pred_check
      _
    $region23: #{cosine_dist.1} parent=1 // pred_check_branch
      %240 = sbr.rel (0) target = $region25
    $region24: #{cosine_dist.1} parent=1 // pred_region
      %241 = dma.done [#allocation6], 128
    $region25: #{cosine_dist.1} parent=1 // pred_fallthru
      _
    %242 = vsyncpa [#allocation6], 1

</llo_original>
